<compile_context>
chip_gen: v7x
topology: tpu7x:2x2x1
jax: 0.10.0
libtpu: 0.0.40
codegen_flags: <defaults>
</compile_context>

<pallas_src>
import jax
import jax.numpy as jnp
from jax.experimental import pallas as pl
from jax.experimental.pallas import tpu as pltpu


def _round_up(x, m):
    return (x + m - 1) // m * m


def _vmem_capacity_bytes():
    try:
        return int(pltpu.get_tpu_info().vmem_capacity_bytes)
    except Exception:
        return 64 * 1024 * 1024  # conservative default (v7x per-core VMEM)


def _vmem_footprint(TB, TN, D_in, NB):
    # Every pallas_call input/output is double-buffered by default, including
    # the grid-invariant weights (index_map constant) -> count them at 2x.
    streamed = 2 * (TB * D_in * 2 + TB * TN * 4)                       # x(bf16) + out(f32)
    resident = 2 * (D_in * NB * 2 + NB * 4 + NB * TN * 2 + TN * 4)     # w1,b1,w2,b2
    interm = TB * NB * 4 + TB * TN * 4                                 # h(f32) + y(f32)
    return streamed + resident + interm


def classblock_kernel(x_ref, w1_ref, b1_ref, w2_ref, b2_ref, out_ref):
    # --- add_block: Linear(input_dim -> num_bottleneck), BN folded, bf16 MXU / f32 acc ---
    h = jnp.dot(x_ref[...], w1_ref[...], preferred_element_type=jnp.float32)
    h = h + b1_ref[...]                              # folded bias/affine [1, NB], f32
    # --- LeakyReLU(negative_slope=0.1) in f32 ---
    h = jnp.maximum(h, 0.1 * h)
    # --- Dropout(p=0.5): identity in eval mode ---
    # --- classifier: Linear(num_bottleneck -> TN column tile), bf16 MXU / f32 acc ---
    y = jnp.dot(h.astype(jnp.bfloat16), w2_ref[...],
                preferred_element_type=jnp.float32)
    out_ref[...] = (y + b2_ref[...]).astype(out_ref.dtype)


def class_block_forward(x, params, *, batch_tile=None):
    """x: [B, input_dim] float32; params: dict of weights/stats (eval mode)."""
    B, D_in = x.shape
    NB = params["w1"].shape[1]
    C = params["w2"].shape[1]
    # NOTE: for production shapes D_in should be a multiple of 128 for full MXU
    # contraction-depth utilization (small D_in is correct, just MXU-underfed).

    # ---- Fold BatchNorm1d (running stats) into the first Linear (f32), then cast ----
    scale = params["gamma"] * jax.lax.rsqrt(params["running_var"] + 1e-5)   # [1, NB]
    w1f = (params["w1"] * scale).astype(jnp.bfloat16)                       # col-wise fold
    b1f = (params["b1"] - params["running_mean"]) * scale + params["beta"]  # [1, NB] f32

    vmem_cap = _vmem_capacity_bytes()

    # ---- Batch tiling: bf16-friendly multiple of 16, generation-dependent cap ----
    cap_rows = 512 if vmem_cap <= 80 * 1024 * 1024 else 1024
    B_min = _round_up(B, 16)
    if batch_tile is None:
        TB = min(cap_rows, B_min)
    else:
        TB = min(_round_up(batch_tile, 16), B_min)
    C_pad = _round_up(C, 128)
    budget = int(0.70 * vmem_cap)
    while TB > 16 and 1.3 * _vmem_footprint(TB, C_pad, D_in, NB) > budget:
        TB = _round_up(TB // 2, 16)
    B_pad = _round_up(B, TB)
    nb = B_pad // TB

    # ---- Classifier column tiling: split columns when the batch grid has a
    #      single step so both TensorCores (v7x) get work. ----
    if nb == 1 and C_pad >= 256:
        C_pad = _round_up(C, 256)
        TN = C_pad // 2
        nc = 2
    else:
        TN = C_pad
        nc = 1

    # ---- Pad classifier output to lane-dense width; cast w2 to bf16 ----
    w2p = jnp.pad(params["w2"], ((0, 0), (0, C_pad - C))).astype(jnp.bfloat16)
    b2p = jnp.pad(params["b2"], ((0, 0), (0, C_pad - C)))                 # f32

    # ---- Stream x in bf16; pad the batch only when needed ----
    xp = x.astype(jnp.bfloat16)
    if B_pad != B:
        xp = jnp.pad(xp, ((0, B_pad - B), (0, 0)))

    grid = (nb, nc)

    # ---- VMEM limit: actual footprint + 30% margin, clamped per generation ----
    footprint = _vmem_footprint(TB, TN, D_in, NB)
    vmem_bytes = int(min(0.85 * vmem_cap, max(32 * 1024 * 1024, 1.3 * footprint)))

    flops = 2 * B_pad * D_in * NB * nc + 2 * B_pad * NB * C_pad
    bytes_accessed = (B_pad * D_in * 2 + D_in * NB * 2 + NB * 4
                      + NB * C_pad * 2 + C_pad * 4 + B_pad * C_pad * 4)

    out = pl.pallas_call(
        classblock_kernel,
        out_shape=jax.ShapeDtypeStruct((B_pad, C_pad), jnp.float32),
        grid=grid,
        in_specs=[
            pl.BlockSpec((TB, D_in), lambda i, j: (i, 0)),    # x: streamed per batch tile
            pl.BlockSpec((D_in, NB), lambda i, j: (0, 0)),    # w1 (BN folded, bf16): resident
            pl.BlockSpec((1, NB), lambda i, j: (0, 0)),       # b1 (folded, f32): resident
            pl.BlockSpec((NB, TN), lambda i, j: (0, j)),      # w2 (padded, bf16): per-column tile
            pl.BlockSpec((1, TN), lambda i, j: (0, j)),       # b2 (padded, f32): per-column tile
        ],
        out_specs=pl.BlockSpec((TB, TN), lambda i, j: (i, j)),
        compiler_params=pltpu.CompilerParams(
            dimension_semantics=("parallel", "parallel"),
            vmem_limit_bytes=vmem_bytes,
        ),
        cost_estimate=pl.CostEstimate(
            flops=flops, transcendentals=0, bytes_accessed=bytes_accessed),
    )(xp, w1f, b1f, w2p, b2p)

    # Keep the padded (lane-dense) buffer if it already matches; only slice when
    # padding was actually introduced (avoids an extra HBM copy for aligned shapes).
    if B_pad == B and C_pad == C:
        return out
    return out[:B, :C]


def init_params(key, input_dim, num_bottleneck, class_num):
    k1, k2, k3 = jax.random.split(key, 3)
    # Linear(input_dim, num_bottleneck): kaiming_normal_(mode='fan_out', a=0)
    #   gain = sqrt(2), fan_out = num_bottleneck  ->  std = sqrt(2 / num_bottleneck)
    std1 = (2.0 / num_bottleneck) ** 0.5
    w1 = jax.random.normal(k1, (input_dim, num_bottleneck), jnp.float32) * std1
    b1 = jnp.zeros((1, num_bottleneck), jnp.float32)
    # BatchNorm1d: weight ~ N(1, 0.02), bias = 0, running stats (0, 1)
    gamma = 1.0 + 0.02 * jax.random.normal(k2, (1, num_bottleneck), jnp.float32)
    beta = jnp.zeros((1, num_bottleneck), jnp.float32)
    running_mean = jnp.zeros((1, num_bottleneck), jnp.float32)
    running_var = jnp.ones((1, num_bottleneck), jnp.float32)
    # classifier Linear(num_bottleneck, class_num): weight ~ N(0, 0.001), bias = 0
    w2 = jax.random.normal(k3, (num_bottleneck, class_num), jnp.float32) * 0.001
    b2 = jnp.zeros((1, class_num), jnp.float32)
    return dict(w1=w1, b1=b1, gamma=gamma, beta=beta,
                running_mean=running_mean, running_var=running_var,
                w2=w2, b2=b2)


if __name__ == "__main__":
    key = jax.random.PRNGKey(0)
    kx, kp = jax.random.split(key)

    B = 8               # batch
    input_dim = 32      # feature dim fed to ClassBlock
    num_bottleneck = 128
    class_num = 16

    x = jax.random.normal(kx, (B, input_dim), jnp.float32)
    params = init_params(kp, input_dim, num_bottleneck, class_num)

    out = class_block_forward(x, params)
    jax.block_until_ready(out)

    # reference check in plain JAX (unfolded eval-mode math, f32, matches PyTorch)
    h = x @ params["w1"] + params["b1"]
    h = (h - params["running_mean"]) * jax.lax.rsqrt(params["running_var"] + 1e-5) \
        * params["gamma"] + params["beta"]
    h = jnp.where(h > 0, h, 0.1 * h)
    ref = h @ params["w2"] + params["b2"]

    assert out.shape == (B, class_num)
    # bf16 MXU operands with f32 accumulation -> compare with bf16-level tolerance
    assert jnp.allclose(out, ref, atol=2e-3, rtol=2e-2), \
        f"max abs diff {jnp.max(jnp.abs(out - ref))}"

    print("KERNEL_OK")
</pallas_src>

<mosaic_0001>
module attributes {stable_mosaic.version = 11 : i64} {
  func.func @classblock_kernel(%arg0: i32, %arg1: i32, %arg2: memref<16x32xbf16, #tpu.memory_space<vmem>>, %arg3: memref<32x128xbf16, #tpu.memory_space<vmem>>, %arg4: memref<1x128xf32, #tpu.memory_space<vmem>>, %arg5: memref<128x128xbf16, #tpu.memory_space<vmem>>, %arg6: memref<1x128xf32, #tpu.memory_space<vmem>>, %arg7: memref<16x128xf32, #tpu.memory_space<vmem>>) attributes {dimension_semantics = [#tpu.dimension_semantics<parallel>, #tpu.dimension_semantics<parallel>], iteration_bounds = array<i64: 1, 1>, scalar_prefetch = 0 : i64, scratch_operands = 0 : i64, tpu.core_type = #tpu.core_type<tc>, window_params = [{transform_indices = @transform_0, window_bounds = array<i64: 16, 32>}, {pipeline_mode = #tpu.pipeline_mode<synchronous>, transform_indices = @transform_1, window_bounds = array<i64: 32, 128>}, {pipeline_mode = #tpu.pipeline_mode<synchronous>, transform_indices = @transform_2, window_bounds = array<i64: 1, 128>}, {transform_indices = @transform_3, window_bounds = array<i64: 128, 128>}, {transform_indices = @transform_4, window_bounds = array<i64: 1, 128>}, {transform_indices = @transform_5, window_bounds = array<i64: 16, 128>}]} {
    %c0 = arith.constant 0 : index
    %c0_0 = arith.constant 0 : index
    %0 = vector.load %arg2[%c0, %c0_0] : memref<16x32xbf16, #tpu.memory_space<vmem>>, vector<16x32xbf16>
    %c0_1 = arith.constant 0 : index
    %c0_2 = arith.constant 0 : index
    %1 = vector.load %arg3[%c0_1, %c0_2] : memref<32x128xbf16, #tpu.memory_space<vmem>>, vector<32x128xbf16>
    %cst = arith.constant dense<0.000000e+00> : vector<16x128xf32>
    %2 = tpu.matmul %0, %1, %cst {dimension_numbers = #tpu.dot_dimension_numbers<[1], [0], [0], [1], [0, 0, 1, 1], [], []>} : vector<16x32xbf16>, vector<32x128xbf16>, vector<16x128xf32> -> vector<16x128xf32>
    %c0_3 = arith.constant 0 : index
    %c0_4 = arith.constant 0 : index
    %3 = vector.load %arg4[%c0_3, %c0_4] : memref<1x128xf32, #tpu.memory_space<vmem>>, vector<1x128xf32>
    %4 = vector.broadcast %3 : vector<1x128xf32> to vector<16x128xf32>
    %5 = arith.addf %2, %4 : vector<16x128xf32>
    %cst_5 = arith.constant 1.000000e-01 : f32
    %6 = vector.broadcast %cst_5 : f32 to vector<16x128xf32>
    %7 = arith.mulf %6, %5 : vector<16x128xf32>
    %8 = arith.maximumf %5, %7 : vector<16x128xf32>
    %9 = arith.truncf %8 : vector<16x128xf32> to vector<16x128xbf16>
    %c0_6 = arith.constant 0 : index
    %c0_7 = arith.constant 0 : index
    %10 = vector.load %arg5[%c0_6, %c0_7] : memref<128x128xbf16, #tpu.memory_space<vmem>>, vector<128x128xbf16>
    %cst_8 = arith.constant dense<0.000000e+00> : vector<16x128xf32>
    %11 = tpu.matmul %9, %10, %cst_8 {dimension_numbers = #tpu.dot_dimension_numbers<[1], [0], [0], [1], [0, 0, 1, 1], [], []>} : vector<16x128xbf16>, vector<128x128xbf16>, vector<16x128xf32> -> vector<16x128xf32>
    %c0_9 = arith.constant 0 : index
    %c0_10 = arith.constant 0 : index
    %12 = vector.load %arg6[%c0_9, %c0_10] : memref<1x128xf32, #tpu.memory_space<vmem>>, vector<1x128xf32>
    %13 = vector.broadcast %12 : vector<1x128xf32> to vector<16x128xf32>
    %14 = arith.addf %11, %13 : vector<16x128xf32>
    %c0_11 = arith.constant 0 : index
    %c0_12 = arith.constant 0 : index
    %15 = vector.load %arg7[%c0_11, %c0_12] : memref<16x128xf32, #tpu.memory_space<vmem>>, vector<16x128xf32>
    tpu.vector_store %arg7[%c0_11, %c0_12], %14 {strides = array<i32>} : memref<16x128xf32, #tpu.memory_space<vmem>>, vector<16x128xf32>,
    return
  }
  func.func @transform_0(%arg0: i32, %arg1: i32) -> (i32, i32) {
    %c0_i32 = arith.constant 0 : i32
    %c0_i32_0 = arith.constant 0 : i32
    return %arg0, %c0_i32 : i32, i32
  }
  func.func @transform_1(%arg0: i32, %arg1: i32) -> (i32, i32) {
    %c0_i32 = arith.constant 0 : i32
    %c0_i32_0 = arith.constant 0 : i32
    %c0_i32_1 = arith.constant 0 : i32
    return %c0_i32, %c0_i32_0 : i32, i32
  }
  func.func @transform_2(%arg0: i32, %arg1: i32) -> (i32, i32) {
    %c0_i32 = arith.constant 0 : i32
    %c0_i32_0 = arith.constant 0 : i32
    %c0_i32_1 = arith.constant 0 : i32
    return %c0_i32, %c0_i32_0 : i32, i32
  }
  func.func @transform_3(%arg0: i32, %arg1: i32) -> (i32, i32) {
    %c0_i32 = arith.constant 0 : i32
    %c0_i32_0 = arith.constant 0 : i32
    return %c0_i32, %arg1 : i32, i32
  }
  func.func @transform_4(%arg0: i32, %arg1: i32) -> (i32, i32) {
    %c0_i32 = arith.constant 0 : i32
    %c0_i32_0 = arith.constant 0 : i32
    return %c0_i32, %arg1 : i32, i32
  }
  func.func @transform_5(%arg0: i32, %arg1: i32) -> (i32, i32) {
    %c0_i32 = arith.constant 0 : i32
    return %arg0, %arg1 : i32, i32
  }
}

</mosaic_0001>

<llo_original>
// kernel: tpu_custom_call.1
$region0: #{tpu_custom_call.1}
  #allocation0 [shape = 'u32[]', space=smem, size = 0x4, offset = 0x4, fixed_abs, tag = 'smem constant byte address 0x4 - core index']
  #allocation1 [shape = 'u32[144,128]{1,0:T(1,128)}', space=vmem, size = 0x12000, scoped, tag = 'internal scratch']
  %s0 = inlined_call_operand.hbm [shape: bf16[16,32], index: 0, kind: input, shape index: {}]
  %s1 = inlined_call_operand.hbm [shape: bf16[32,128], index: 1, kind: input, shape index: {}]
  %s2 = inlined_call_operand.vmem [shape: f32[1,128], index: 2, kind: input, shape index: {}]
  %s3 = inlined_call_operand.hbm [shape: bf16[128,128], index: 3, kind: input, shape index: {}]
  %s4 = inlined_call_operand.vmem [shape: f32[1,128], index: 4, kind: input, shape index: {}]
  %s5 = inlined_call_operand.hbm [shape: f32[16,128], index: 5, kind: output, shape index: {}]
  %s6 = sld [smem:[#allocation0]]
  $region42: #{tpu_custom_call.1} parent=0
    _
  %s8 = ssub.s32 1, %s6
  %s9 = scalar_select 0, %s8, %s6
  $region1: #{tpu_custom_call.1} parent=0
    #allocation2 [shape = 'u8[4096]{0}', space=vmem, size = 0x1000, scoped, tag = 'input window, operand 0, single buffered']
    #allocation3 [shape = 's32[1]{0}', space=sflag, size = 0x4, scoped, tag = 'scoped memory for tpu_custom_call.1']
    #allocation4 [shape = 's32[1]{0}', space=sflag, size = 0x4, scoped, tag = 'scoped memory for tpu_custom_call.1']
    #allocation5 [shape = 'u8[8192]{0}', space=vmem, size = 0x2000, scoped, tag = 'input window, operand 1, single buffered']
    #allocation6 [shape = 's32[1]{0}', space=sflag, size = 0x4, scoped, tag = 'scoped memory for tpu_custom_call.1']
    #allocation7 [shape = 'u8[32768]{0}', space=vmem, size = 0x8000, scoped, tag = 'input window, operand 3, single buffered']
    #allocation8 [shape = 'u8[8192]{0}', space=vmem, size = 0x2000, scoped, tag = 'output window, operand 0, single buffered']
    %10 = vsyncpa [#allocation3], 0
    %11 = vsyncpa [#allocation6], 0
    %12 = vsyncpa [#allocation4], 0
    // Predicated region
    $region2: #{tpu_custom_call.1} parent=1 // pred_check
      _
    $region3: #{tpu_custom_call.1} parent=1 // pred_check_branch
      %14 = sbr.rel (0) target = $region5
    $region4: #{tpu_custom_call.1} parent=1 // pred_region
      %s16 = ssub.s32 128, 128
      %17 = vsyncadd [#allocation3], %s16
      %s18 = sshll.u32 [#allocation2], 4
      %s19 = int_to_ptr.vmem [resolvable:$true] %s18
      %24 = dma.hbm_to_vmem [thread:$0]  %s0, 128, %s19, [#allocation3], 64, 64, 4
    $region5: #{tpu_custom_call.1} parent=1 // pred_fallthru
      _
    // Predicated region
    $region6: #{tpu_custom_call.1} parent=1 // pred_check
      _
    $region7: #{tpu_custom_call.1} parent=1 // pred_check_branch
      %26 = sbr.rel (0) target = $region9
    $region8: #{tpu_custom_call.1} parent=1 // pred_region
      %s28 = ssub.s32 256, 256
      %29 = vsyncadd [#allocation6], %s28
      %s30 = sshll.u32 [#allocation5], 4
      %s31 = int_to_ptr.vmem [resolvable:$true] %s30
      %36 = dma.hbm_to_vmem [thread:$0]  %s1, 256, %s31, [#allocation6], 64, 64, 4
    $region9: #{tpu_custom_call.1} parent=1 // pred_fallthru
      _
    // Predicated region
    $region10: #{tpu_custom_call.1} parent=1 // pred_check
      _
    $region11: #{tpu_custom_call.1} parent=1 // pred_check_branch
      %38 = sbr.rel (0) target = $region13
    $region12: #{tpu_custom_call.1} parent=1 // pred_region
      _
    $region13: #{tpu_custom_call.1} parent=1 // pred_fallthru
      _
    // Predicated region
    $region14: #{tpu_custom_call.1} parent=1 // pred_check
      _
    $region15: #{tpu_custom_call.1} parent=1 // pred_check_branch
      %40 = sbr.rel (0) target = $region17
    $region16: #{tpu_custom_call.1} parent=1 // pred_region
      %s42 = ssub.s32 1024, 1024
      %43 = vsyncadd [#allocation6], %s42
      %s44 = sshll.u32 [#allocation7], 4
      %s45 = int_to_ptr.vmem [resolvable:$true] %s44
      %50 = dma.hbm_to_vmem [thread:$0]  %s3, 1024, %s45, [#allocation6], 64, 64, 4
    $region17: #{tpu_custom_call.1} parent=1 // pred_fallthru
      _
    // Predicated region
    $region18: #{tpu_custom_call.1} parent=1 // pred_check
      _
    $region19: #{tpu_custom_call.1} parent=1 // pred_check_branch
      %52 = sbr.rel (0) target = $region21
    $region20: #{tpu_custom_call.1} parent=1 // pred_region
      _
    $region21: #{tpu_custom_call.1} parent=1 // pred_fallthru
      _
    // Predicated region
    $region22: #{tpu_custom_call.1} parent=1 // pred_check
      _
    $region23: #{tpu_custom_call.1} parent=1 // pred_check_branch
      %54 = sbr.rel (0) target = $region25
    $region24: #{tpu_custom_call.1} parent=1 // pred_region
      %55 = dma.done [#allocation3], 128
    $region25: #{tpu_custom_call.1} parent=1 // pred_fallthru
      _
    // Predicated region
    $region26: #{tpu_custom_call.1} parent=1 // pred_check
      _
    $region27: #{tpu_custom_call.1} parent=1 // pred_check_branch
      %57 = sbr.rel (0) target = $region29
    $region28: #{tpu_custom_call.1} parent=1 // pred_region
      %58 = dma.done [#allocation6], 256
    $region29: #{tpu_custom_call.1} parent=1 // pred_fallthru
      _
    // Predicated region
    $region30: #{tpu_custom_call.1} parent=1 // pred_check
      _
    $region31: #{tpu_custom_call.1} parent=1 // pred_check_branch
      %60 = sbr.rel (0) target = $region33
    $region32: #{tpu_custom_call.1} parent=1 // pred_region
      %61 = dma.done [#allocation6], 1024
    $region33: #{tpu_custom_call.1} parent=1 // pred_fallthru
      _
    %v63 = vld [vmem:[#allocation2] sm:$0xf]
    %v64 = vld [vmem:[#allocation2 + $0x4] sm:$0xf]
    %v65 = vld [vmem:[#allocation5] sm:$0xf]
    %v66 = vld [vmem:[#allocation5 + $0x4] sm:$0xf]
    %v67 = vld [vmem:[#allocation5 + $0x8] sm:$0xf]
    %v68 = vld [vmem:[#allocation5 + $0xc] sm:$0xf]
    %v69 = vld [vmem:[%s2] sm:$0x1]
    %v71 = vlaneseq
    %v72 = vshrl.u32 %v71, 7
    %v73 = vsub.s32 0, %v72
    %v74 = vrot.slane %v69, %v73
    %v78 = vunpack.c.l.b16 %v63
    %v79 = vunpack.c.l.b16 %v64
    %v80 = vpack.c.b16 %v79, %v78
    %v85 = vunpack.c.l.b16 %v65
    %v86 = vunpack.c.l.b16 %v66
    %v87 = vunpack.c.l.b16 %v67
    %v88 = vunpack.c.l.b16 %v68
    %v89 = vpack.c.b16 %v86, %v85
    %v90 = vpack.c.b16 %v88, %v87
    %vm93 = vcmask 261120
    %v95 = vsel %vm93, %v80, 0
    %97 = vmatprep.subr.bf16.mxu0 0
    %98 = vmatpush1.bf16.msra.mxu0 %v89
    %99 = vmatprep.subr.bf16.mxu0 0
    %100 = vmatpush1.bf16.msra.mxu0 %v90
    %101 = vmatprep.subr.bf16.mxu0 0
    %102 = vmatpush1.bf16.msra.mxu0 0
    %103 = vmatprep.subr.bf16.mxu0 0
    %104 = vmatpush1.bf16.msra.mxu0 0
    %105 = vmatprep.subr.bf16.mxu0 0
    %106 = vmatpush1.bf16.msra.mxu0 0
    %107 = vmatprep.subr.bf16.mxu0 0
    %108 = vmatpush1.bf16.msra.mxu0 0
    %109 = vmatprep.subr.bf16.mxu0 0
    %110 = vmatpush1.bf16.msra.mxu0 0
    %111 = vmatprep.subr.bf16.mxu0 0
    %112 = vmatpush1.bf16.msra.mxu0 0
    %113 = vmatprep.subr.bf16.mxu0 0
    %114 = vmatpush1.bf16.msra.mxu0 0
    %115 = vmatprep.subr.bf16.mxu0 0
    %116 = vmatpush1.bf16.msra.mxu0 0
    %117 = vmatprep.subr.bf16.mxu0 0
    %118 = vmatpush1.bf16.msra.mxu0 0
    %119 = vmatprep.subr.bf16.mxu0 0
    %120 = vmatpush1.bf16.msra.mxu0 0
    %121 = vmatprep.subr.bf16.mxu0 0
    %122 = vmatpush1.bf16.msra.mxu0 0
    %123 = vmatprep.subr.bf16.mxu0 0
    %124 = vmatpush1.bf16.msra.mxu0 0
    %125 = vmatprep.subr.bf16.mxu0 0
    %126 = vmatpush1.bf16.msra.mxu0 0
    %127 = vmatprep.subr.bf16.mxu0 0
    %128 = vmatpush1.bf16.msra.mxu0 0
    %129 = vmatprep.mubr.bf16.mxu0 0
    %130 = vmatmul.mubr.bf16.gmra.mrb[0].mxu0 %v95
    %v131 = vpop.f32.mrb[0].mxu0
    %v132 = vadd.f32 %v74, %v131
    %v133 = vpop.f32.mrb[0].mxu0
    %v134 = vpop.f32.mrb[0].mxu0
    %v135 = vadd.f32 %v74, %v134
    %v136 = vpop.f32.mrb[0].mxu0
    %137 = vdwg.mxu0
    %v138 = vmul.f32 %v132, 0.1
    %v139 = vmul.f32 %v135, 0.1
    %v140 = vmax.f32 %v132, %v138
    %v141 = vmax.f32 %v135, %v139
    %v142 = vpack.c.bf16 %v141, %v140
    %v143 = vld [vmem:[#allocation7] sm:$0xf]
    %v144 = vld [vmem:[#allocation7 + $0x4] sm:$0xf]
    %v145 = vld [vmem:[#allocation7 + $0x8] sm:$0xf]
    %v146 = vld [vmem:[#allocation7 + $0xc] sm:$0xf]
    %v147 = vld [vmem:[#allocation7 + $0x10] sm:$0xf]
    %v148 = vld [vmem:[#allocation7 + $0x14] sm:$0xf]
    %v149 = vld [vmem:[#allocation7 + $0x18] sm:$0xf]
    %v150 = vld [vmem:[#allocation7 + $0x1c] sm:$0xf]
    %v151 = vld [vmem:[#allocation7 + $0x20] sm:$0xf]
    %v152 = vld [vmem:[#allocation7 + $0x24] sm:$0xf]
    %v153 = vld [vmem:[#allocation7 + $0x28] sm:$0xf]
    %v154 = vld [vmem:[#allocation7 + $0x2c] sm:$0xf]
    %v155 = vld [vmem:[#allocation7 + $0x30] sm:$0xf]
    %v156 = vld [vmem:[#allocation7 + $0x34] sm:$0xf]
    %v157 = vld [vmem:[#allocation7 + $0x38] sm:$0xf]
    %v158 = vld [vmem:[#allocation7 + $0x3c] sm:$0xf]
    %v159 = vld [vmem:[%s4] sm:$0x1]
    %v161 = vlaneseq
    %v162 = vshrl.u32 %v161, 7
    %v163 = vsub.s32 0, %v162
    %v164 = vrot.slane %v159, %v163
    %v182 = vunpack.c.l.b16 %v143
    %v183 = vunpack.c.l.b16 %v144
    %v184 = vunpack.c.l.b16 %v145
    %v185 = vunpack.c.l.b16 %v146
    %v186 = vunpack.c.l.b16 %v147
    %v187 = vunpack.c.l.b16 %v148
    %v188 = vunpack.c.l.b16 %v149
    %v189 = vunpack.c.l.b16 %v150
    %v190 = vunpack.c.l.b16 %v151
    %v191 = vunpack.c.l.b16 %v152
    %v192 = vunpack.c.l.b16 %v153
    %v193 = vunpack.c.l.b16 %v154
    %v194 = vunpack.c.l.b16 %v155
    %v195 = vunpack.c.l.b16 %v156
    %v196 = vunpack.c.l.b16 %v157
    %v197 = vunpack.c.l.b16 %v158
    %v198 = vpack.c.b16 %v183, %v182
    %v199 = vpack.c.b16 %v185, %v184
    %v200 = vpack.c.b16 %v187, %v186
    %v201 = vpack.c.b16 %v189, %v188
    %v202 = vpack.c.b16 %v191, %v190
    %v203 = vpack.c.b16 %v193, %v192
    %v204 = vpack.c.b16 %v195, %v194
    %v205 = vpack.c.b16 %v197, %v196
    %214 = vmatprep.subr.bf16.mxu0 0
    %215 = vmatpush1.bf16.msra.mxu0 %v198
    %216 = vmatprep.subr.bf16.mxu0 0
    %217 = vmatpush1.bf16.msra.mxu0 %v199
    %218 = vmatprep.subr.bf16.mxu0 0
    %219 = vmatpush1.bf16.msra.mxu0 %v200
    %220 = vmatprep.subr.bf16.mxu0 0
    %221 = vmatpush1.bf16.msra.mxu0 %v201
    %222 = vmatprep.subr.bf16.mxu0 0
    %223 = vmatpush1.bf16.msra.mxu0 %v202
    %224 = vmatprep.subr.bf16.mxu0 0
    %225 = vmatpush1.bf16.msra.mxu0 %v203
    %226 = vmatprep.subr.bf16.mxu0 0
    %227 = vmatpush1.bf16.msra.mxu0 %v204
    %228 = vmatprep.subr.bf16.mxu0 0
    %229 = vmatpush1.bf16.msra.mxu0 %v205
    %230 = vmatprep.subr.bf16.mxu0 0
    %231 = vmatpush1.bf16.msra.mxu0 0
    %232 = vmatprep.subr.bf16.mxu0 0
    %233 = vmatpush1.bf16.msra.mxu0 0
    %234 = vmatprep.subr.bf16.mxu0 0
    %235 = vmatpush1.bf16.msra.mxu0 0
    %236 = vmatprep.subr.bf16.mxu0 0
    %237 = vmatpush1.bf16.msra.mxu0 0
    %238 = vmatprep.subr.bf16.mxu0 0
    %239 = vmatpush1.bf16.msra.mxu0 0
    %240 = vmatprep.subr.bf16.mxu0 0
    %241 = vmatpush1.bf16.msra.mxu0 0
    %242 = vmatprep.subr.bf16.mxu0 0
    %243 = vmatpush1.bf16.msra.mxu0 0
    %244 = vmatprep.subr.bf16.mxu0 0
    %245 = vmatpush1.bf16.msra.mxu0 0
    %246 = vmatprep.mubr.bf16.mxu0 0
    %247 = vmatmul.mubr.bf16.gmra.mrb[0].mxu0 %v142
    %v248 = vpop.f32.mrb[0].mxu0
    %v249 = vadd.f32 %v164, %v248
    %v250 = vpop.f32.mrb[0].mxu0
    %v251 = vpop.f32.mrb[0].mxu0
    %v252 = vadd.f32 %v164, %v251
    %v253 = vpop.f32.mrb[0].mxu0
    %254 = vdwg.mxu0
    %255 = vst [vmem:[#allocation8] sm:$0xff] %v249
    %256 = vst [vmem:[#allocation8 + $0x8] sm:$0xff] %v252
    // Predicated region
    $region34: #{tpu_custom_call.1} parent=1 // pred_check
      _
    $region35: #{tpu_custom_call.1} parent=1 // pred_check_branch
      %258 = sbr.rel (0) target = $region37
    $region36: #{tpu_custom_call.1} parent=1 // pred_region
      %s260 = ssub.s32 256, 256
      %261 = vsyncadd [#allocation4], %s260
      %s262 = sshll.u32 [#allocation8], 4
      %s263 = int_to_ptr.vmem [resolvable:$true] %s262
      %268 = dma.vmem_to_hbm [thread:$0]  %s263, 256, %s5, [#allocation4], 128, 128, 8
    $region37: #{tpu_custom_call.1} parent=1 // pred_fallthru
      _
    // Predicated region
    $region38: #{tpu_custom_call.1} parent=1 // pred_check
      _
    $region39: #{tpu_custom_call.1} parent=1 // pred_check_branch
      %270 = sbr.rel (0) target = $region41
    $region40: #{tpu_custom_call.1} parent=1 // pred_region
      %271 = dma.done [#allocation4], 256
    $region41: #{tpu_custom_call.1} parent=1 // pred_fallthru
      _
    %272 = vsyncpa [#allocation3], 1
    %273 = vsyncpa [#allocation6], 1
    %274 = vsyncpa [#allocation4], 1

</llo_original>
